<compile_context>
chip_gen: v7x
topology: tpu7x:2x2x1
jax: 0.10.0
libtpu: 0.0.40
codegen_flags: <defaults>
</compile_context>

<pallas_src>
import numpy as np
import jax
import jax.numpy as jnp
from jax.experimental import pallas as pl
from jax.experimental.pallas import tpu as pltpu


def _vmem():
    return pl.BlockSpec(memory_space=pltpu.MemorySpace.VMEM)


# ---------------------------------------------------------------------------
# Fused Pallas kernel: bi-LSTM (1 layer) -> last-step output -> Linear
# ---------------------------------------------------------------------------
def _bilstm_fc_kernel(x_ref, wih_ref, b_ref, whh_ref,
                      wfc_f_ref, wfc_b_ref, bfc_ref, out_ref):
    """
    x_ref     : (T*Bp, obs) bf16  time-major, batch padded to multiple of 8
    wih_ref   : (obs, 8H)   bf16  [fwd i,f,g,o | bwd i,f,g,o] along lanes
    b_ref     : (1, 8H)     f32   combined biases (b_ih + b_hh), both dirs
    whh_ref   : (H, 4H)     bf16  forward hidden->gate weights
    wfc_f_ref : (H, out)    bf16  fc weight half acting on h_fwd
    wfc_b_ref : (H, out)    bf16  fc weight half acting on h_bwd
    bfc_ref   : (1, out)    f32
    out_ref   : (Bp, out)   f32
    """
    TB, _ = x_ref.shape
    Bp = out_ref.shape[0]
    T = TB // Bp
    H = whh_ref.shape[0]

    def dot(a, b):
        return jnp.dot(a, b, preferred_element_type=jnp.float32)

    # ---- hoisted input projection for BOTH directions: one MXU push --------
    xp = dot(x_ref[...], wih_ref[...]) + b_ref[...]          # (T*Bp, 8H) f32

    # ---- forward recurrence (fully unrolled; only h @ W_hh is serial) ------
    whh = whh_ref[...]                                       # (H, 4H) bf16
    h = jnp.zeros((Bp, H), jnp.float32)
    c = jnp.zeros((Bp, H), jnp.float32)
    for t in range(T):
        g_x = xp[t * Bp:(t + 1) * Bp, :4 * H]                # contiguous slice
        gates = g_x + dot(h.astype(whh.dtype), whh)          # (Bp, 4H) f32
        sig = jax.nn.sigmoid(gates)                          # 1 EUP push / step
        i = sig[:, 0 * H:1 * H]
        f = sig[:, 1 * H:2 * H]
        g = jnp.tanh(gates[:, 2 * H:3 * H])
        o = sig[:, 3 * H:4 * H]
        c = f * c + i * g
        h = o * jnp.tanh(c)
    h_fwd = h

    # ---- backward direction: single step from zero state on x[:, T-1] ------
    # (valid only because initial h/c are zero and only r_out[:, -1, :] is used)
    gb = xp[(T - 1) * Bp:T * Bp, 4 * H:8 * H]                # (Bp, 4H) f32
    sig_b = jax.nn.sigmoid(gb)
    i_b = sig_b[:, 0 * H:1 * H]
    g_b = jnp.tanh(gb[:, 2 * H:3 * H])
    o_b = sig_b[:, 3 * H:4 * H]
    h_bwd = o_b * jnp.tanh(i_b * g_b)

    # ---- fc on the two halves: no lane concat, two small MXU dots ----------
    out_ref[...] = (dot(h_fwd.astype(wfc_f_ref.dtype), wfc_f_ref[...])
                    + dot(h_bwd.astype(wfc_b_ref.dtype), wfc_b_ref[...])
                    + bfc_ref[...])


# ---------------------------------------------------------------------------
# Module wrapper (packs weights once at __init__; wrapper does all layout work)
# ---------------------------------------------------------------------------
class LSTMPallas:
    """JAX/Pallas equivalent of the PyTorch `LSTM` module (defaults)."""

    # TODO(synk): only the module defaults (rnn_num_layer=1, use_bilstm=True)
    # are implemented; deeper stacks / unidirectional configs are not translated.
    # TODO(synk): for large B on v7x, add a batch-block grid with
    # dimension_semantics=("parallel",) to use both TensorCores; at these
    # shapes the kernel is latency-bound and gridless whole-array VMEM is fine.

    def __init__(self, key, obs_dim, out_dim, t):
        self.T = int(t)
        self.obs_dim = int(obs_dim)
        self.out_dim = int(out_dim)
        H = int(out_dim)                      # rnn_dim = out_dim in the module
        self.H = H

        ks = jax.random.split(key, 10)
        kb = 1.0 / np.sqrt(H)
        fb = 1.0 / np.sqrt(2 * H)

        def u(k, shape, bound):
            return jax.random.uniform(k, shape, jnp.float32, -bound, bound)

        # PyTorch-layout parameters (w_ih: (4H, obs), w_hh: (4H, H), b: (4H,))
        w_ih_f = u(ks[0], (4 * H, obs_dim), kb)
        w_hh_f = u(ks[1], (4 * H, H), kb)
        b_ih_f = u(ks[2], (4 * H,), kb)
        b_hh_f = u(ks[3], (4 * H,), kb)
        w_ih_b = u(ks[4], (4 * H, obs_dim), kb)
        w_hh_b = u(ks[5], (4 * H, H), kb)     # not needed by the fused kernel
        b_ih_b = u(ks[6], (4 * H,), kb)
        b_hh_b = u(ks[7], (4 * H,), kb)
        w_fc = u(ks[8], (out_dim, 2 * H), fb)
        b_fc = u(ks[9], (out_dim,), fb)

        # kept in PyTorch layout for the pure-JAX reference
        self.torch_params = dict(w_ih_f=w_ih_f, w_hh_f=w_hh_f, b_ih_f=b_ih_f,
                                 b_hh_f=b_hh_f, w_ih_b=w_ih_b, w_hh_b=w_hh_b,
                                 b_ih_b=b_ih_b, b_hh_b=b_hh_b,
                                 w_fc=w_fc, b_fc=b_fc)

        # ---- packed-at-init kernel layouts --------------------------------
        # fused fwd+bwd input projection (obs, 8H), gates i,f,g,o on lanes
        wih = jnp.concatenate([w_ih_f.T, w_ih_b.T], axis=1)          # (obs, 8H)
        bias = jnp.concatenate([b_ih_f + b_hh_f,
                                b_ih_b + b_hh_b]).reshape(1, 8 * H)  # (1, 8H)
        self.packed = dict(
            wih=wih.astype(jnp.bfloat16),                            # (obs, 8H)
            b=bias.astype(jnp.float32),
            whh_f=jnp.asarray(w_hh_f.T).astype(jnp.bfloat16),        # (H, 4H)
            wfc_f=jnp.asarray(w_fc[:, :H].T).astype(jnp.bfloat16),   # (H, out)
            wfc_b=jnp.asarray(w_fc[:, H:].T).astype(jnp.bfloat16),   # (H, out)
            bfc=jnp.asarray(b_fc.reshape(1, out_dim)).astype(jnp.float32),
        )

    def __call__(self, x):
        x = jnp.asarray(x, jnp.float32).reshape(-1, self.T, self.obs_dim)
        B = x.shape[0]
        Bp = max(8, ((B + 7) // 8) * 8)       # pad batch to sublane granularity
        if Bp != B:
            x = jnp.pad(x, ((0, Bp - B), (0, 0), (0, 0)))
        # wrapper-side layout: time-major, flattened, bf16 (free XLA plumbing)
        x_tm = jnp.transpose(x, (1, 0, 2)).reshape(self.T * Bp, self.obs_dim)
        x_tm = x_tm.astype(jnp.bfloat16)

        p = self.packed
        args = (x_tm, p['wih'], p['b'], p['whh_f'],
                p['wfc_f'], p['wfc_b'], p['bfc'])
        out = pl.pallas_call(
            _bilstm_fc_kernel,
            out_shape=jax.ShapeDtypeStruct((Bp, self.out_dim), jnp.float32),
            in_specs=[_vmem()] * len(args),
            out_specs=_vmem(),
        )(*args)
        return out[:B]

    # ---- pure-JAX reference: full f32 bidirectional pass (verification) ----
    def reference(self, x):
        p = self.torch_params
        H = self.H
        x = jnp.asarray(x, jnp.float32).reshape(-1, self.T, self.obs_dim)
        B = x.shape[0]

        def run(x_seq, w_ih, w_hh, b_ih, b_hh):
            h = jnp.zeros((B, H), jnp.float32)
            c = jnp.zeros((B, H), jnp.float32)
            outs = []
            for t in range(x_seq.shape[1]):
                g = x_seq[:, t, :] @ w_ih.T + b_ih + h @ w_hh.T + b_hh
                i = jax.nn.sigmoid(g[:, :H])
                f = jax.nn.sigmoid(g[:, H:2 * H])
                gg = jnp.tanh(g[:, 2 * H:3 * H])
                o = jax.nn.sigmoid(g[:, 3 * H:])
                c = f * c + i * gg
                h = o * jnp.tanh(c)
                outs.append(h)
            return jnp.stack(outs, axis=1)

        out_f = run(x, p['w_ih_f'], p['w_hh_f'], p['b_ih_f'], p['b_hh_f'])
        out_b = run(x[:, ::-1, :], p['w_ih_b'], p['w_hh_b'],
                    p['b_ih_b'], p['b_hh_b'])[:, ::-1, :]
        r_last = jnp.concatenate([out_f[:, -1, :], out_b[:, -1, :]], axis=1)
        return r_last @ p['w_fc'].T + p['b_fc']


# ---------------------------------------------------------------------------
if __name__ == "__main__":
    key = jax.random.PRNGKey(0)
    k_model, k_x = jax.random.split(key)

    B, T, obs_dim, out_dim = 4, 6, 10, 32     # H = out_dim = 32 -> 4H = 128 lanes
    model = LSTMPallas(k_model, obs_dim=obs_dim, out_dim=out_dim, t=T)

    x = jax.random.normal(k_x, (B, T, obs_dim), jnp.float32)

    y = model(x)
    jax.block_until_ready(y)

    # silent numerical check against a pure-JAX full f32 bi-LSTM reference
    # (tolerance widened slightly for bf16 MXU operands)
    y_ref = model.reference(x)
    np.testing.assert_allclose(np.asarray(y), np.asarray(y_ref),
                               rtol=1e-2, atol=1e-2)

    print("KERNEL_OK")
</pallas_src>

<mosaic_0001>
module attributes {stable_mosaic.version = 11 : i64} {
  func.func @_bilstm_fc_kernel(%arg0: memref<48x10xbf16, #tpu.memory_space<vmem>>, %arg1: memref<10x256xbf16, #tpu.memory_space<vmem>>, %arg2: memref<1x256xf32, #tpu.memory_space<vmem>>, %arg3: memref<32x128xbf16, #tpu.memory_space<vmem>>, %arg4: memref<32x32xbf16, #tpu.memory_space<vmem>>, %arg5: memref<32x32xbf16, #tpu.memory_space<vmem>>, %arg6: memref<1x32xf32, #tpu.memory_space<vmem>>, %arg7: memref<8x32xf32, #tpu.memory_space<vmem>>) attributes {dimension_semantics = [], scalar_prefetch = 0 : i64, scratch_operands = 0 : i64, tpu.core_type = #tpu.core_type<tc>} {
    %c0 = arith.constant 0 : index
    %c0_0 = arith.constant 0 : index
    %0 = vector.load %arg0[%c0, %c0_0] : memref<48x10xbf16, #tpu.memory_space<vmem>>, vector<48x10xbf16>
    %c0_1 = arith.constant 0 : index
    %c0_2 = arith.constant 0 : index
    %1 = vector.load %arg1[%c0_1, %c0_2] : memref<10x256xbf16, #tpu.memory_space<vmem>>, vector<10x256xbf16>
    %cst = arith.constant dense<0.000000e+00> : vector<48x256xf32>
    %2 = tpu.matmul %0, %1, %cst {dimension_numbers = #tpu.dot_dimension_numbers<[1], [0], [0], [1], [0, 0, 1, 1], [], []>} : vector<48x10xbf16>, vector<10x256xbf16>, vector<48x256xf32> -> vector<48x256xf32>
    %c0_3 = arith.constant 0 : index
    %c0_4 = arith.constant 0 : index
    %3 = vector.load %arg2[%c0_3, %c0_4] : memref<1x256xf32, #tpu.memory_space<vmem>>, vector<1x256xf32>
    %4 = vector.broadcast %3 : vector<1x256xf32> to vector<48x256xf32>
    %5 = arith.addf %2, %4 : vector<48x256xf32>
    %c0_5 = arith.constant 0 : index
    %c0_6 = arith.constant 0 : index
    %6 = vector.load %arg3[%c0_5, %c0_6] : memref<32x128xbf16, #tpu.memory_space<vmem>>, vector<32x128xbf16>
    %cst_7 = arith.constant 0.000000e+00 : f32
    %7 = vector.broadcast %cst_7 : f32 to vector<8x32xf32>
    %cst_8 = arith.constant 0.000000e+00 : f32
    %8 = vector.broadcast %cst_8 : f32 to vector<8x32xf32>
    %9 = vector.extract_strided_slice %5 {offsets = [0, 0], sizes = [8, 128], strides = [1, 1]} : vector<48x256xf32> to vector<8x128xf32>
    %10 = arith.truncf %7 : vector<8x32xf32> to vector<8x32xbf16>
    %cst_9 = arith.constant dense<0.000000e+00> : vector<8x128xf32>
    %11 = tpu.matmul %10, %6, %cst_9 {dimension_numbers = #tpu.dot_dimension_numbers<[1], [0], [0], [1], [0, 0, 1, 1], [], []>} : vector<8x32xbf16>, vector<32x128xbf16>, vector<8x128xf32> -> vector<8x128xf32>
    %12 = arith.addf %9, %11 : vector<8x128xf32>
    %13 = arith.negf %12 : vector<8x128xf32>
    %14 = math.exp %13 : vector<8x128xf32>
    %cst_10 = arith.constant 1.000000e+00 : f32
    %15 = vector.broadcast %cst_10 : f32 to vector<8x128xf32>
    %16 = arith.addf %15, %14 : vector<8x128xf32>
    %17 = arith.divf %15, %16 : vector<8x128xf32>
    %18 = vector.extract_strided_slice %17 {offsets = [0, 0], sizes = [8, 32], strides = [1, 1]} : vector<8x128xf32> to vector<8x32xf32>
    %19 = vector.extract_strided_slice %17 {offsets = [0, 32], sizes = [8, 32], strides = [1, 1]} : vector<8x128xf32> to vector<8x32xf32>
    %20 = vector.extract_strided_slice %12 {offsets = [0, 64], sizes = [8, 32], strides = [1, 1]} : vector<8x128xf32> to vector<8x32xf32>
    %21 = math.tanh %20 : vector<8x32xf32>
    %22 = vector.extract_strided_slice %17 {offsets = [0, 96], sizes = [8, 32], strides = [1, 1]} : vector<8x128xf32> to vector<8x32xf32>
    %23 = arith.mulf %19, %8 : vector<8x32xf32>
    %24 = arith.mulf %18, %21 : vector<8x32xf32>
    %25 = arith.addf %23, %24 : vector<8x32xf32>
    %26 = math.tanh %25 : vector<8x32xf32>
    %27 = arith.mulf %22, %26 : vector<8x32xf32>
    %28 = vector.extract_strided_slice %5 {offsets = [8, 0], sizes = [8, 128], strides = [1, 1]} : vector<48x256xf32> to vector<8x128xf32>
    %29 = arith.truncf %27 : vector<8x32xf32> to vector<8x32xbf16>
    %cst_11 = arith.constant dense<0.000000e+00> : vector<8x128xf32>
    %30 = tpu.matmul %29, %6, %cst_11 {dimension_numbers = #tpu.dot_dimension_numbers<[1], [0], [0], [1], [0, 0, 1, 1], [], []>} : vector<8x32xbf16>, vector<32x128xbf16>, vector<8x128xf32> -> vector<8x128xf32>
    %31 = arith.addf %28, %30 : vector<8x128xf32>
    %32 = arith.negf %31 : vector<8x128xf32>
    %33 = math.exp %32 : vector<8x128xf32>
    %cst_12 = arith.constant 1.000000e+00 : f32
    %34 = vector.broadcast %cst_12 : f32 to vector<8x128xf32>
    %35 = arith.addf %34, %33 : vector<8x128xf32>
    %36 = arith.divf %34, %35 : vector<8x128xf32>
    %37 = vector.extract_strided_slice %36 {offsets = [0, 0], sizes = [8, 32], strides = [1, 1]} : vector<8x128xf32> to vector<8x32xf32>
    %38 = vector.extract_strided_slice %36 {offsets = [0, 32], sizes = [8, 32], strides = [1, 1]} : vector<8x128xf32> to vector<8x32xf32>
    %39 = vector.extract_strided_slice %31 {offsets = [0, 64], sizes = [8, 32], strides = [1, 1]} : vector<8x128xf32> to vector<8x32xf32>
    %40 = math.tanh %39 : vector<8x32xf32>
    %41 = vector.extract_strided_slice %36 {offsets = [0, 96], sizes = [8, 32], strides = [1, 1]} : vector<8x128xf32> to vector<8x32xf32>
    %42 = arith.mulf %38, %25 : vector<8x32xf32>
    %43 = arith.mulf %37, %40 : vector<8x32xf32>
    %44 = arith.addf %42, %43 : vector<8x32xf32>
    %45 = math.tanh %44 : vector<8x32xf32>
    %46 = arith.mulf %41, %45 : vector<8x32xf32>
    %47 = vector.extract_strided_slice %5 {offsets = [16, 0], sizes = [8, 128], strides = [1, 1]} : vector<48x256xf32> to vector<8x128xf32>
    %48 = arith.truncf %46 : vector<8x32xf32> to vector<8x32xbf16>
    %cst_13 = arith.constant dense<0.000000e+00> : vector<8x128xf32>
    %49 = tpu.matmul %48, %6, %cst_13 {dimension_numbers = #tpu.dot_dimension_numbers<[1], [0], [0], [1], [0, 0, 1, 1], [], []>} : vector<8x32xbf16>, vector<32x128xbf16>, vector<8x128xf32> -> vector<8x128xf32>
    %50 = arith.addf %47, %49 : vector<8x128xf32>
    %51 = arith.negf %50 : vector<8x128xf32>
    %52 = math.exp %51 : vector<8x128xf32>
    %cst_14 = arith.constant 1.000000e+00 : f32
    %53 = vector.broadcast %cst_14 : f32 to vector<8x128xf32>
    %54 = arith.addf %53, %52 : vector<8x128xf32>
    %55 = arith.divf %53, %54 : vector<8x128xf32>
    %56 = vector.extract_strided_slice %55 {offsets = [0, 0], sizes = [8, 32], strides = [1, 1]} : vector<8x128xf32> to vector<8x32xf32>
    %57 = vector.extract_strided_slice %55 {offsets = [0, 32], sizes = [8, 32], strides = [1, 1]} : vector<8x128xf32> to vector<8x32xf32>
    %58 = vector.extract_strided_slice %50 {offsets = [0, 64], sizes = [8, 32], strides = [1, 1]} : vector<8x128xf32> to vector<8x32xf32>
    %59 = math.tanh %58 : vector<8x32xf32>
    %60 = vector.extract_strided_slice %55 {offsets = [0, 96], sizes = [8, 32], strides = [1, 1]} : vector<8x128xf32> to vector<8x32xf32>
    %61 = arith.mulf %57, %44 : vector<8x32xf32>
    %62 = arith.mulf %56, %59 : vector<8x32xf32>
    %63 = arith.addf %61, %62 : vector<8x32xf32>
    %64 = math.tanh %63 : vector<8x32xf32>
    %65 = arith.mulf %60, %64 : vector<8x32xf32>
    %66 = vector.extract_strided_slice %5 {offsets = [24, 0], sizes = [8, 128], strides = [1, 1]} : vector<48x256xf32> to vector<8x128xf32>
    %67 = arith.truncf %65 : vector<8x32xf32> to vector<8x32xbf16>
    %cst_15 = arith.constant dense<0.000000e+00> : vector<8x128xf32>
    %68 = tpu.matmul %67, %6, %cst_15 {dimension_numbers = #tpu.dot_dimension_numbers<[1], [0], [0], [1], [0, 0, 1, 1], [], []>} : vector<8x32xbf16>, vector<32x128xbf16>, vector<8x128xf32> -> vector<8x128xf32>
    %69 = arith.addf %66, %68 : vector<8x128xf32>
    %70 = arith.negf %69 : vector<8x128xf32>
    %71 = math.exp %70 : vector<8x128xf32>
    %cst_16 = arith.constant 1.000000e+00 : f32
    %72 = vector.broadcast %cst_16 : f32 to vector<8x128xf32>
    %73 = arith.addf %72, %71 : vector<8x128xf32>
    %74 = arith.divf %72, %73 : vector<8x128xf32>
    %75 = vector.extract_strided_slice %74 {offsets = [0, 0], sizes = [8, 32], strides = [1, 1]} : vector<8x128xf32> to vector<8x32xf32>
    %76 = vector.extract_strided_slice %74 {offsets = [0, 32], sizes = [8, 32], strides = [1, 1]} : vector<8x128xf32> to vector<8x32xf32>
    %77 = vector.extract_strided_slice %69 {offsets = [0, 64], sizes = [8, 32], strides = [1, 1]} : vector<8x128xf32> to vector<8x32xf32>
    %78 = math.tanh %77 : vector<8x32xf32>
    %79 = vector.extract_strided_slice %74 {offsets = [0, 96], sizes = [8, 32], strides = [1, 1]} : vector<8x128xf32> to vector<8x32xf32>
    %80 = arith.mulf %76, %63 : vector<8x32xf32>
    %81 = arith.mulf %75, %78 : vector<8x32xf32>
    %82 = arith.addf %80, %81 : vector<8x32xf32>
    %83 = math.tanh %82 : vector<8x32xf32>
    %84 = arith.mulf %79, %83 : vector<8x32xf32>
    %85 = vector.extract_strided_slice %5 {offsets = [32, 0], sizes = [8, 128], strides = [1, 1]} : vector<48x256xf32> to vector<8x128xf32>
    %86 = arith.truncf %84 : vector<8x32xf32> to vector<8x32xbf16>
    %cst_17 = arith.constant dense<0.000000e+00> : vector<8x128xf32>
    %87 = tpu.matmul %86, %6, %cst_17 {dimension_numbers = #tpu.dot_dimension_numbers<[1], [0], [0], [1], [0, 0, 1, 1], [], []>} : vector<8x32xbf16>, vector<32x128xbf16>, vector<8x128xf32> -> vector<8x128xf32>
    %88 = arith.addf %85, %87 : vector<8x128xf32>
    %89 = arith.negf %88 : vector<8x128xf32>
    %90 = math.exp %89 : vector<8x128xf32>
    %cst_18 = arith.constant 1.000000e+00 : f32
    %91 = vector.broadcast %cst_18 : f32 to vector<8x128xf32>
    %92 = arith.addf %91, %90 : vector<8x128xf32>
    %93 = arith.divf %91, %92 : vector<8x128xf32>
    %94 = vector.extract_strided_slice %93 {offsets = [0, 0], sizes = [8, 32], strides = [1, 1]} : vector<8x128xf32> to vector<8x32xf32>
    %95 = vector.extract_strided_slice %93 {offsets = [0, 32], sizes = [8, 32], strides = [1, 1]} : vector<8x128xf32> to vector<8x32xf32>
    %96 = vector.extract_strided_slice %88 {offsets = [0, 64], sizes = [8, 32], strides = [1, 1]} : vector<8x128xf32> to vector<8x32xf32>
    %97 = math.tanh %96 : vector<8x32xf32>
    %98 = vector.extract_strided_slice %93 {offsets = [0, 96], sizes = [8, 32], strides = [1, 1]} : vector<8x128xf32> to vector<8x32xf32>
    %99 = arith.mulf %95, %82 : vector<8x32xf32>
    %100 = arith.mulf %94, %97 : vector<8x32xf32>
    %101 = arith.addf %99, %100 : vector<8x32xf32>
    %102 = math.tanh %101 : vector<8x32xf32>
    %103 = arith.mulf %98, %102 : vector<8x32xf32>
    %104 = vector.extract_strided_slice %5 {offsets = [40, 0], sizes = [8, 128], strides = [1, 1]} : vector<48x256xf32> to vector<8x128xf32>
    %105 = arith.truncf %103 : vector<8x32xf32> to vector<8x32xbf16>
    %cst_19 = arith.constant dense<0.000000e+00> : vector<8x128xf32>
    %106 = tpu.matmul %105, %6, %cst_19 {dimension_numbers = #tpu.dot_dimension_numbers<[1], [0], [0], [1], [0, 0, 1, 1], [], []>} : vector<8x32xbf16>, vector<32x128xbf16>, vector<8x128xf32> -> vector<8x128xf32>
    %107 = arith.addf %104, %106 : vector<8x128xf32>
    %108 = arith.negf %107 : vector<8x128xf32>
    %109 = math.exp %108 : vector<8x128xf32>
    %cst_20 = arith.constant 1.000000e+00 : f32
    %110 = vector.broadcast %cst_20 : f32 to vector<8x128xf32>
    %111 = arith.addf %110, %109 : vector<8x128xf32>
    %112 = arith.divf %110, %111 : vector<8x128xf32>
    %113 = vector.extract_strided_slice %112 {offsets = [0, 0], sizes = [8, 32], strides = [1, 1]} : vector<8x128xf32> to vector<8x32xf32>
    %114 = vector.extract_strided_slice %112 {offsets = [0, 32], sizes = [8, 32], strides = [1, 1]} : vector<8x128xf32> to vector<8x32xf32>
    %115 = vector.extract_strided_slice %107 {offsets = [0, 64], sizes = [8, 32], strides = [1, 1]} : vector<8x128xf32> to vector<8x32xf32>
    %116 = math.tanh %115 : vector<8x32xf32>
    %117 = vector.extract_strided_slice %112 {offsets = [0, 96], sizes = [8, 32], strides = [1, 1]} : vector<8x128xf32> to vector<8x32xf32>
    %118 = arith.mulf %114, %101 : vector<8x32xf32>
    %119 = arith.mulf %113, %116 : vector<8x32xf32>
    %120 = arith.addf %118, %119 : vector<8x32xf32>
    %121 = math.tanh %120 : vector<8x32xf32>
    %122 = arith.mulf %117, %121 : vector<8x32xf32>
    %123 = vector.extract_strided_slice %5 {offsets = [40, 128], sizes = [8, 128], strides = [1, 1]} : vector<48x256xf32> to vector<8x128xf32>
    %124 = arith.negf %123 : vector<8x128xf32>
    %125 = math.exp %124 : vector<8x128xf32>
    %cst_21 = arith.constant 1.000000e+00 : f32
    %126 = vector.broadcast %cst_21 : f32 to vector<8x128xf32>
    %127 = arith.addf %126, %125 : vector<8x128xf32>
    %128 = arith.divf %126, %127 : vector<8x128xf32>
    %129 = vector.extract_strided_slice %128 {offsets = [0, 0], sizes = [8, 32], strides = [1, 1]} : vector<8x128xf32> to vector<8x32xf32>
    %130 = vector.extract_strided_slice %123 {offsets = [0, 64], sizes = [8, 32], strides = [1, 1]} : vector<8x128xf32> to vector<8x32xf32>
    %131 = math.tanh %130 : vector<8x32xf32>
    %132 = vector.extract_strided_slice %128 {offsets = [0, 96], sizes = [8, 32], strides = [1, 1]} : vector<8x128xf32> to vector<8x32xf32>
    %133 = arith.mulf %129, %131 : vector<8x32xf32>
    %134 = math.tanh %133 : vector<8x32xf32>
    %135 = arith.mulf %132, %134 : vector<8x32xf32>
    %136 = arith.truncf %122 : vector<8x32xf32> to vector<8x32xbf16>
    %c0_22 = arith.constant 0 : index
    %c0_23 = arith.constant 0 : index
    %137 = vector.load %arg4[%c0_22, %c0_23] : memref<32x32xbf16, #tpu.memory_space<vmem>>, vector<32x32xbf16>
    %cst_24 = arith.constant dense<0.000000e+00> : vector<8x32xf32>
    %138 = tpu.matmul %136, %137, %cst_24 {dimension_numbers = #tpu.dot_dimension_numbers<[1], [0], [0], [1], [0, 0, 1, 1], [], []>} : vector<8x32xbf16>, vector<32x32xbf16>, vector<8x32xf32> -> vector<8x32xf32>
    %139 = arith.truncf %135 : vector<8x32xf32> to vector<8x32xbf16>
    %c0_25 = arith.constant 0 : index
    %c0_26 = arith.constant 0 : index
    %140 = vector.load %arg5[%c0_25, %c0_26] : memref<32x32xbf16, #tpu.memory_space<vmem>>, vector<32x32xbf16>
    %cst_27 = arith.constant dense<0.000000e+00> : vector<8x32xf32>
    %141 = tpu.matmul %139, %140, %cst_27 {dimension_numbers = #tpu.dot_dimension_numbers<[1], [0], [0], [1], [0, 0, 1, 1], [], []>} : vector<8x32xbf16>, vector<32x32xbf16>, vector<8x32xf32> -> vector<8x32xf32>
    %142 = arith.addf %138, %141 : vector<8x32xf32>
    %c0_28 = arith.constant 0 : index
    %c0_29 = arith.constant 0 : index
    %143 = vector.load %arg6[%c0_28, %c0_29] : memref<1x32xf32, #tpu.memory_space<vmem>>, vector<1x32xf32>
    %144 = vector.broadcast %143 : vector<1x32xf32> to vector<8x32xf32>
    %145 = arith.addf %142, %144 : vector<8x32xf32>
    %c0_30 = arith.constant 0 : index
    %c0_31 = arith.constant 0 : index
    %146 = vector.load %arg7[%c0_30, %c0_31] : memref<8x32xf32, #tpu.memory_space<vmem>>, vector<8x32xf32>
    tpu.vector_store %arg7[%c0_30, %c0_31], %145 {strides = array<i32>} : memref<8x32xf32, #tpu.memory_space<vmem>>, vector<8x32xf32>,
    return
  }
}

</mosaic_0001>

<llo_original>
// kernel: tpu_custom_call.1
$region0: #{tpu_custom_call.1}
  #allocation0 [shape = 'u32[]', space=smem, size = 0x4, offset = 0x4, fixed_abs, tag = 'smem constant byte address 0x4 - core index']
  #allocation1 [shape = 'u32[144,128]{1,0:T(1,128)}', space=vmem, size = 0x12000, scoped, tag = 'internal scratch']
  %s0 = inlined_call_operand.vmem [shape: bf16[48,10], index: 0, kind: input, shape index: {}]
  %s1 = inlined_call_operand.vmem [shape: bf16[10,256], index: 1, kind: input, shape index: {}]
  %s2 = inlined_call_operand.vmem [shape: f32[1,256], index: 2, kind: input, shape index: {}]
  %s3 = inlined_call_operand.vmem [shape: bf16[32,128], index: 3, kind: input, shape index: {}]
  %s4 = inlined_call_operand.hbm [shape: bf16[32,32], index: 4, kind: input, shape index: {}]
  %s5 = inlined_call_operand.vmem [shape: bf16[32,32], index: 5, kind: input, shape index: {}]
  %s6 = inlined_call_operand.vmem [shape: f32[1,32], index: 6, kind: input, shape index: {}]
  %s7 = inlined_call_operand.hbm [shape: f32[8,32], index: 7, kind: output, shape index: {}]
  %s8 = sld [smem:[#allocation0]]
  $region42: #{tpu_custom_call.1} parent=0
    _
  %s10 = ssub.s32 1, %s8
  %s11 = scalar_select 0, %s10, %s8
  $region1: #{tpu_custom_call.1} parent=0
    #allocation2 [shape = 'u8[8192]{0}', space=vmem, size = 0x2000, scoped, tag = 'input window, operand 4, single buffered']
    #allocation3 [shape = 's32[1]{0}', space=sflag, size = 0x4, scoped, tag = 'scoped memory for tpu_custom_call.1']
    #allocation4 [shape = 's32[1]{0}', space=sflag, size = 0x4, scoped, tag = 'scoped memory for tpu_custom_call.1']
    #allocation5 [shape = 'u8[4096]{0}', space=vmem, size = 0x1000, scoped, tag = 'output window, operand 0, single buffered']
    %12 = vsyncpa [#allocation3], 0
    %13 = vsyncpa [#allocation4], 0
    // Predicated region
    $region2: #{tpu_custom_call.1} parent=1 // pred_check
      _
    $region3: #{tpu_custom_call.1} parent=1 // pred_check_branch
      %15 = sbr.rel (0) target = $region5
    $region4: #{tpu_custom_call.1} parent=1 // pred_region
      _
    $region5: #{tpu_custom_call.1} parent=1 // pred_fallthru
      _
    // Predicated region
    $region6: #{tpu_custom_call.1} parent=1 // pred_check
      _
    $region7: #{tpu_custom_call.1} parent=1 // pred_check_branch
      %17 = sbr.rel (0) target = $region9
    $region8: #{tpu_custom_call.1} parent=1 // pred_region
      _
    $region9: #{tpu_custom_call.1} parent=1 // pred_fallthru
      _
    // Predicated region
    $region10: #{tpu_custom_call.1} parent=1 // pred_check
      _
    $region11: #{tpu_custom_call.1} parent=1 // pred_check_branch
      %19 = sbr.rel (0) target = $region13
    $region12: #{tpu_custom_call.1} parent=1 // pred_region
      _
    $region13: #{tpu_custom_call.1} parent=1 // pred_fallthru
      _
    // Predicated region
    $region14: #{tpu_custom_call.1} parent=1 // pred_check
      _
    $region15: #{tpu_custom_call.1} parent=1 // pred_check_branch
      %21 = sbr.rel (0) target = $region17
    $region16: #{tpu_custom_call.1} parent=1 // pred_region
      _
    $region17: #{tpu_custom_call.1} parent=1 // pred_fallthru
      _
    // Predicated region
    $region18: #{tpu_custom_call.1} parent=1 // pred_check
      _
    $region19: #{tpu_custom_call.1} parent=1 // pred_check_branch
      %23 = sbr.rel (0) target = $region21
    $region20: #{tpu_custom_call.1} parent=1 // pred_region
      %s25 = ssub.s32 256, 256
      %26 = vsyncadd [#allocation3], %s25
      %s27 = sshll.u32 [#allocation2], 4
      %s28 = int_to_ptr.vmem [resolvable:$true] %s27
      %33 = dma.hbm_to_vmem [thread:$0]  %s4, 256, %s28, [#allocation3], 64, 64, 4
    $region21: #{tpu_custom_call.1} parent=1 // pred_fallthru
      _
    // Predicated region
    $region22: #{tpu_custom_call.1} parent=1 // pred_check
      _
    $region23: #{tpu_custom_call.1} parent=1 // pred_check_branch
      %35 = sbr.rel (0) target = $region25
    $region24: #{tpu_custom_call.1} parent=1 // pred_region
      _
    $region25: #{tpu_custom_call.1} parent=1 // pred_fallthru
      _
    // Predicated region
    $region26: #{tpu_custom_call.1} parent=1 // pred_check
      _
    $region27: #{tpu_custom_call.1} parent=1 // pred_check_branch
      %37 = sbr.rel (0) target = $region29
    $region28: #{tpu_custom_call.1} parent=1 // pred_region
      _
    $region29: #{tpu_custom_call.1} parent=1 // pred_fallthru
      _
    // Predicated region
    $region30: #{tpu_custom_call.1} parent=1 // pred_check
      _
    $region31: #{tpu_custom_call.1} parent=1 // pred_check_branch
      %39 = sbr.rel (0) target = $region33
    $region32: #{tpu_custom_call.1} parent=1 // pred_region
      %40 = dma.done [#allocation3], 256
    $region33: #{tpu_custom_call.1} parent=1 // pred_fallthru
      _
    %v42 = vld [vmem:[%s0] sm:$0xf]
    %v43 = vld [vmem:[%s0 + $0x4] sm:$0xf]
    %v44 = vld [vmem:[%s0 + $0x8] sm:$0xf]
    %v45 = vld [vmem:[%s0 + $0xc] sm:$0xf]
    %v46 = vld [vmem:[%s0 + $0x10] sm:$0xf]
    %v47 = vld [vmem:[%s0 + $0x14] sm:$0xf]
    %v48 = vld [vmem:[%s1] sm:$0xff]
    %v49 = vld [vmem:[%s1 + $0x8] sm:$0x11]
    %v50 = vld [vmem:[%s2] sm:$0x3]
    %v52 = vlaneseq
    %v53 = vshrl.u32 %v52, 7
    %v54 = vsub.s32 0, %v53
    %v55 = vrot.slane %v50, %v54
    %v56 = vlaneseq
    %v57 = vshrl.u32 %v56, 7
    %v58 = vsub.s32 1, %v57
    %v59 = vrot.slane %v50, %v58
    %v68 = vunpack.c.l.b16 %v42
    %v69 = vunpack.c.l.b16 %v43
    %v70 = vunpack.c.l.b16 %v44
    %v71 = vunpack.c.l.b16 %v45
    %v72 = vunpack.c.l.b16 %v46
    %v73 = vunpack.c.l.b16 %v47
    %v74 = vpack.c.b16 %v69, %v68
    %v75 = vpack.c.b16 %v71, %v70
    %v76 = vpack.c.b16 %v73, %v72
    %v79 = vunpack.c.l.b16 %v48
    %v80 = vunpack.c.h.b16 %v48
    %v81 = vunpack.c.l.b16 %v49
    %v82 = vunpack.c.h.b16 %v49
    %v83 = vpack.c.b16 %v81, %v79
    %v84 = vpack.c.b16 %v82, %v80
    %vm85 = vcmask 80896
    %v87 = vsel %vm85, %v74, 0
    %v90 = vsel %vm85, %v75, 0
    %v93 = vsel %vm85, %v76, 0
    %vm95 = vcmask 1044480
    %v97 = vsel %vm95, %v83, 0
    %v100 = vsel %vm95, %v84, 0
    %102 = vmatprep.subr.bf16.mxu0 %v100
    %103 = vmatpush1.bf16.msra.mxu0 %v97
    %104 = vmatprep.subr.bf16.mxu0 0
    %105 = vmatpush1.bf16.msra.mxu0 0
    %106 = vmatprep.subr.bf16.mxu0 0
    %107 = vmatpush1.bf16.msra.mxu0 0
    %108 = vmatprep.subr.bf16.mxu0 0
    %109 = vmatpush1.bf16.msra.mxu0 0
    %110 = vmatprep.subr.bf16.mxu0 0
    %111 = vmatpush1.bf16.msra.mxu0 0
    %112 = vmatprep.subr.bf16.mxu0 0
    %113 = vmatpush1.bf16.msra.mxu0 0
    %114 = vmatprep.subr.bf16.mxu0 0
    %115 = vmatpush1.bf16.msra.mxu0 0
    %116 = vmatprep.subr.bf16.mxu0 0
    %117 = vmatpush1.bf16.msra.mxu0 0
    %118 = vmatprep.subr.bf16.mxu0 0
    %119 = vmatpush1.bf16.msra.mxu0 0
    %120 = vmatprep.subr.bf16.mxu0 0
    %121 = vmatpush1.bf16.msra.mxu0 0
    %122 = vmatprep.subr.bf16.mxu0 0
    %123 = vmatpush1.bf16.msra.mxu0 0
    %124 = vmatprep.subr.bf16.mxu0 0
    %125 = vmatpush1.bf16.msra.mxu0 0
    %126 = vmatprep.subr.bf16.mxu0 0
    %127 = vmatpush1.bf16.msra.mxu0 0
    %128 = vmatprep.subr.bf16.mxu0 0
    %129 = vmatpush1.bf16.msra.mxu0 0
    %130 = vmatprep.subr.bf16.mxu0 0
    %131 = vmatpush1.bf16.msra.mxu0 0
    %132 = vmatprep.subr.bf16.mxu0 0
    %133 = vmatpush1.bf16.msra.mxu0 0
    %134 = vmatprep.mubr.bf16.mxu0 0
    %135 = vmatmul.mubr.bf16.gmra.mrb[0].mxu0 %v87
    %v136 = vpop.f32.mrb[0].mxu0
    %v137 = vadd.f32 %v55, %v136
    %v138 = vpop.f32.mrb[0].mxu0
    %v139 = vpop.f32.mrb[0].mxu0
    %v140 = vadd.f32 %v55, %v139
    %v141 = vpop.f32.mrb[0].mxu0
    %142 = vmatprep.mubr.bf16.mxu0 0
    %143 = vmatmul.mubr.bf16.gmra.mrb[0].mxu0 %v90
    %v144 = vpop.f32.mrb[0].mxu0
    %v145 = vadd.f32 %v55, %v144
    %v146 = vpop.f32.mrb[0].mxu0
    %v147 = vpop.f32.mrb[0].mxu0
    %v148 = vadd.f32 %v55, %v147
    %v149 = vpop.f32.mrb[0].mxu0
    %150 = vmatprep.mubr.bf16.mxu0 0
    %151 = vmatmul.mubr.bf16.gmra.mrb[0].mxu0 %v93
    %v152 = vpop.f32.mrb[0].mxu0
    %v153 = vadd.f32 %v55, %v152
    %v154 = vpop.f32.mrb[0].mxu0
    %v155 = vpop.f32.mrb[0].mxu0
    %v156 = vadd.f32 %v55, %v155
    %v157 = vpop.f32.mrb[0].mxu0
    %v158 = vadd.f32 %v59, %v157
    %159 = vdwg.mxu0
    %v160 = vld [vmem:[%s3] sm:$0xf]
    %v161 = vld [vmem:[%s3 + $0x4] sm:$0xf]
    %v162 = vld [vmem:[%s3 + $0x8] sm:$0xf]
    %v163 = vld [vmem:[%s3 + $0xc] sm:$0xf]
    %v168 = vunpack.c.l.b16 %v160
    %v169 = vunpack.c.l.b16 %v161
    %v170 = vunpack.c.l.b16 %v162
    %v171 = vunpack.c.l.b16 %v163
    %v172 = vpack.c.b16 %v169, %v168
    %v173 = vpack.c.b16 %v171, %v170
    %vm176 = vcmask 261120
    %v178 = vsel %vm176, 0, 0
    %180 = vmatprep.subr.bf16.mxu0 0
    %181 = vmatpush1.bf16.msra.mxu0 %v172
    %182 = vmatprep.subr.bf16.mxu0 0
    %183 = vmatpush1.bf16.msra.mxu0 %v173
    %184 = vmatprep.subr.bf16.mxu0 0
    %185 = vmatpush1.bf16.msra.mxu0 0
    %186 = vmatprep.subr.bf16.mxu0 0
    %187 = vmatpush1.bf16.msra.mxu0 0
    %188 = vmatprep.subr.bf16.mxu0 0
    %189 = vmatpush1.bf16.msra.mxu0 0
    %190 = vmatprep.subr.bf16.mxu0 0
    %191 = vmatpush1.bf16.msra.mxu0 0
    %192 = vmatprep.subr.bf16.mxu0 0
    %193 = vmatpush1.bf16.msra.mxu0 0
    %194 = vmatprep.subr.bf16.mxu0 0
    %195 = vmatpush1.bf16.msra.mxu0 0
    %196 = vmatprep.subr.bf16.mxu0 0
    %197 = vmatpush1.bf16.msra.mxu0 0
    %198 = vmatprep.subr.bf16.mxu0 0
    %199 = vmatpush1.bf16.msra.mxu0 0
    %200 = vmatprep.subr.bf16.mxu0 0
    %201 = vmatpush1.bf16.msra.mxu0 0
    %202 = vmatprep.subr.bf16.mxu0 0
    %203 = vmatpush1.bf16.msra.mxu0 0
    %204 = vmatprep.subr.bf16.mxu0 0
    %205 = vmatpush1.bf16.msra.mxu0 0
    %206 = vmatprep.subr.bf16.mxu0 0
    %207 = vmatpush1.bf16.msra.mxu0 0
    %208 = vmatprep.subr.bf16.mxu0 0
    %209 = vmatpush1.bf16.msra.mxu0 0
    %210 = vmatprep.subr.bf16.mxu0 0
    %211 = vmatpush1.bf16.msra.mxu0 0
    %212 = vmatprep.mubr.bf16.mxu0 0
    %213 = vmatmul.mubr.bf16.gmra.mrb[0].mxu0 %v178
    %v214 = vpop.f32.mrb[0].mxu0
    %v215 = vadd.f32 0.0, %v214
    %v216 = vpop.f32.mrb[0].mxu0
    %v217 = vpop.f32.mrb[0].mxu0
    %v218 = vpop.f32.mrb[0].mxu0
    %219 = vdwg.mxu0
    %v220 = vadd.f32 %v137, %v215
    %v221 = vxor.u32 %v220, 2147483648
    %v222 = vmul.f32 %v221, 1.442695
    %v223 = vpow.pop %v222
    %v224 = vadd.f32 %v223, 1.0
    %v225 = vrcp.pop %v224
    %v226 = vmul.f32 1.0, %v225
    %v227 = vtanh.pop %v220
    %v228 = vmul.f32 %v226, 0.0
    %230 = vrot.lane.b32.xlu0 %v227, 64
    %v231 = vpop.permute.xlu0 %230
    %v233 = vmul.f32 %v226, %v231
    %235 = vrot.lane.b32.xlu0 %v233, 32
    %v236 = vpop.permute.xlu0 %235
    %v238 = vadd.f32 %v228, %v236
    %v239 = vtanh.pop %v238
    %241 = vrot.lane.b32.xlu0 %v239, 64
    %v242 = vpop.permute.xlu0 %241
    %v244 = vmul.f32 %v226, %v242
    %v245 = vpack.c.bf16 %v244, %v244
    %247 = vrot.lane.b32.xlu0 %v245, 32
    %v248 = vpop.permute.xlu0 %247
    %v250 = vsel %vm176, %v248, 0
    %252 = vmatprep.subr.bf16.mxu0 0
    %253 = vmatpush1.bf16.msra.mxu0 %v172
    %254 = vmatprep.subr.bf16.mxu0 0
    %255 = vmatpush1.bf16.msra.mxu0 %v173
    %256 = vmatprep.subr.bf16.mxu0 0
    %257 = vmatpush1.bf16.msra.mxu0 0
    %258 = vmatprep.subr.bf16.mxu0 0
    %259 = vmatpush1.bf16.msra.mxu0 0
    %260 = vmatprep.subr.bf16.mxu0 0
    %261 = vmatpush1.bf16.msra.mxu0 0
    %262 = vmatprep.subr.bf16.mxu0 0
    %263 = vmatpush1.bf16.msra.mxu0 0
    %264 = vmatprep.subr.bf16.mxu0 0
    %265 = vmatpush1.bf16.msra.mxu0 0
    %266 = vmatprep.subr.bf16.mxu0 0
    %267 = vmatpush1.bf16.msra.mxu0 0
    %268 = vmatprep.subr.bf16.mxu0 0
    %269 = vmatpush1.bf16.msra.mxu0 0
    %270 = vmatprep.subr.bf16.mxu0 0
    %271 = vmatpush1.bf16.msra.mxu0 0
    %272 = vmatprep.subr.bf16.mxu0 0
    %273 = vmatpush1.bf16.msra.mxu0 0
    %274 = vmatprep.subr.bf16.mxu0 0
    %275 = vmatpush1.bf16.msra.mxu0 0
    %276 = vmatprep.subr.bf16.mxu0 0
    %277 = vmatpush1.bf16.msra.mxu0 0
    %278 = vmatprep.subr.bf16.mxu0 0
    %279 = vmatpush1.bf16.msra.mxu0 0
    %280 = vmatprep.subr.bf16.mxu0 0
    %281 = vmatpush1.bf16.msra.mxu0 0
    %282 = vmatprep.subr.bf16.mxu0 0
    %283 = vmatpush1.bf16.msra.mxu0 0
    %284 = vmatprep.mubr.bf16.mxu0 0
    %285 = vmatmul.mubr.bf16.gmra.mrb[0].mxu0 %v250
    %v286 = vpop.f32.mrb[0].mxu0
    %v287 = vadd.f32 0.0, %v286
    %v288 = vpop.f32.mrb[0].mxu0
    %v289 = vpop.f32.mrb[0].mxu0
    %v290 = vpop.f32.mrb[0].mxu0
    %291 = vdwg.mxu0
    %v292 = vadd.f32 %v140, %v287
    %v293 = vxor.u32 %v292, 2147483648
    %v294 = vmul.f32 %v293, 1.442695
    %v295 = vpow.pop %v294
    %v296 = vadd.f32 %v295, 1.0
    %v297 = vrcp.pop %v296
    %v298 = vmul.f32 1.0, %v297
    %v299 = vtanh.pop %v292
    %v300 = vmul.f32 %v298, %v238
    %302 = vrot.lane.b32.xlu0 %v299, 64
    %v303 = vpop.permute.xlu0 %302
    %v305 = vmul.f32 %v298, %v303
    %307 = vrot.lane.b32.xlu0 %v305, 32
    %v308 = vpop.permute.xlu0 %307
    %v310 = vadd.f32 %v300, %v308
    %v311 = vtanh.pop %v310
    %313 = vrot.lane.b32.xlu0 %v311, 64
    %v314 = vpop.permute.xlu0 %313
    %v316 = vmul.f32 %v298, %v314
    %v317 = vpack.c.bf16 %v316, %v316
    %319 = vrot.lane.b32.xlu0 %v317, 32
    %v320 = vpop.permute.xlu0 %319
    %v322 = vsel %vm176, %v320, 0
    %324 = vmatprep.subr.bf16.mxu0 0
    %325 = vmatpush1.bf16.msra.mxu0 %v172
    %326 = vmatprep.subr.bf16.mxu0 0
    %327 = vmatpush1.bf16.msra.mxu0 %v173
    %328 = vmatprep.subr.bf16.mxu0 0
    %329 = vmatpush1.bf16.msra.mxu0 0
    %330 = vmatprep.subr.bf16.mxu0 0
    %331 = vmatpush1.bf16.msra.mxu0 0
    %332 = vmatprep.subr.bf16.mxu0 0
    %333 = vmatpush1.bf16.msra.mxu0 0
    %334 = vmatprep.subr.bf16.mxu0 0
    %335 = vmatpush1.bf16.msra.mxu0 0
    %336 = vmatprep.subr.bf16.mxu0 0
    %337 = vmatpush1.bf16.msra.mxu0 0
    %338 = vmatprep.subr.bf16.mxu0 0
    %339 = vmatpush1.bf16.msra.mxu0 0
    %340 = vmatprep.subr.bf16.mxu0 0
    %341 = vmatpush1.bf16.msra.mxu0 0
    %342 = vmatprep.subr.bf16.mxu0 0
    %343 = vmatpush1.bf16.msra.mxu0 0
    %344 = vmatprep.subr.bf16.mxu0 0
    %345 = vmatpush1.bf16.msra.mxu0 0
    %346 = vmatprep.subr.bf16.mxu0 0
    %347 = vmatpush1.bf16.msra.mxu0 0
    %348 = vmatprep.subr.bf16.mxu0 0
    %349 = vmatpush1.bf16.msra.mxu0 0
    %350 = vmatprep.subr.bf16.mxu0 0
    %351 = vmatpush1.bf16.msra.mxu0 0
    %352 = vmatprep.subr.bf16.mxu0 0
    %353 = vmatpush1.bf16.msra.mxu0 0
    %354 = vmatprep.subr.bf16.mxu0 0
    %355 = vmatpush1.bf16.msra.mxu0 0
    %356 = vmatprep.mubr.bf16.mxu0 0
    %357 = vmatmul.mubr.bf16.gmra.mrb[0].mxu0 %v322
    %v358 = vpop.f32.mrb[0].mxu0
    %v359 = vadd.f32 0.0, %v358
    %v360 = vpop.f32.mrb[0].mxu0
    %v361 = vpop.f32.mrb[0].mxu0
    %v362 = vpop.f32.mrb[0].mxu0
    %363 = vdwg.mxu0
    %v364 = vadd.f32 %v145, %v359
    %v365 = vxor.u32 %v364, 2147483648
    %v366 = vmul.f32 %v365, 1.442695
    %v367 = vpow.pop %v366
    %v368 = vadd.f32 %v367, 1.0
    %v369 = vrcp.pop %v368
    %v370 = vmul.f32 1.0, %v369
    %v371 = vtanh.pop %v364
    %v372 = vmul.f32 %v370, %v310
    %374 = vrot.lane.b32.xlu0 %v371, 64
    %v375 = vpop.permute.xlu0 %374
    %v377 = vmul.f32 %v370, %v375
    %379 = vrot.lane.b32.xlu0 %v377, 32
    %v380 = vpop.permute.xlu0 %379
    %v382 = vadd.f32 %v372, %v380
    %v383 = vtanh.pop %v382
    %385 = vrot.lane.b32.xlu0 %v383, 64
    %v386 = vpop.permute.xlu0 %385
    %v388 = vmul.f32 %v370, %v386
    %v389 = vpack.c.bf16 %v388, %v388
    %391 = vrot.lane.b32.xlu0 %v389, 32
    %v392 = vpop.permute.xlu0 %391
    %v394 = vsel %vm176, %v392, 0
    %396 = vmatprep.subr.bf16.mxu0 0
    %397 = vmatpush1.bf16.msra.mxu0 %v172
    %398 = vmatprep.subr.bf16.mxu0 0
    %399 = vmatpush1.bf16.msra.mxu0 %v173
    %400 = vmatprep.subr.bf16.mxu0 0
    %401 = vmatpush1.bf16.msra.mxu0 0
    %402 = vmatprep.subr.bf16.mxu0 0
    %403 = vmatpush1.bf16.msra.mxu0 0
    %404 = vmatprep.subr.bf16.mxu0 0
    %405 = vmatpush1.bf16.msra.mxu0 0
    %406 = vmatprep.subr.bf16.mxu0 0
    %407 = vmatpush1.bf16.msra.mxu0 0
    %408 = vmatprep.subr.bf16.mxu0 0
    %409 = vmatpush1.bf16.msra.mxu0 0
    %410 = vmatprep.subr.bf16.mxu0 0
    %411 = vmatpush1.bf16.msra.mxu0 0
    %412 = vmatprep.subr.bf16.mxu0 0
    %413 = vmatpush1.bf16.msra.mxu0 0
    %414 = vmatprep.subr.bf16.mxu0 0
    %415 = vmatpush1.bf16.msra.mxu0 0
    %416 = vmatprep.subr.bf16.mxu0 0
    %417 = vmatpush1.bf16.msra.mxu0 0
    %418 = vmatprep.subr.bf16.mxu0 0
    %419 = vmatpush1.bf16.msra.mxu0 0
    %420 = vmatprep.subr.bf16.mxu0 0
    %421 = vmatpush1.bf16.msra.mxu0 0
    %422 = vmatprep.subr.bf16.mxu0 0
    %423 = vmatpush1.bf16.msra.mxu0 0
    %424 = vmatprep.subr.bf16.mxu0 0
    %425 = vmatpush1.bf16.msra.mxu0 0
    %426 = vmatprep.subr.bf16.mxu0 0
    %427 = vmatpush1.bf16.msra.mxu0 0
    %428 = vmatprep.mubr.bf16.mxu0 0
    %429 = vmatmul.mubr.bf16.gmra.mrb[0].mxu0 %v394
    %v430 = vpop.f32.mrb[0].mxu0
    %v431 = vadd.f32 0.0, %v430
    %v432 = vpop.f32.mrb[0].mxu0
    %v433 = vpop.f32.mrb[0].mxu0
    %v434 = vpop.f32.mrb[0].mxu0
    %435 = vdwg.mxu0
    %v436 = vadd.f32 %v148, %v431
    %v437 = vxor.u32 %v436, 2147483648
    %v438 = vmul.f32 %v437, 1.442695
    %v439 = vpow.pop %v438
    %v440 = vadd.f32 %v439, 1.0
    %v441 = vrcp.pop %v440
    %v442 = vmul.f32 1.0, %v441
    %v443 = vtanh.pop %v436
    %v444 = vmul.f32 %v442, %v382
    %446 = vrot.lane.b32.xlu0 %v443, 64
    %v447 = vpop.permute.xlu0 %446
    %v449 = vmul.f32 %v442, %v447
    %451 = vrot.lane.b32.xlu0 %v449, 32
    %v452 = vpop.permute.xlu0 %451
    %v454 = vadd.f32 %v444, %v452
    %v455 = vtanh.pop %v454
    %457 = vrot.lane.b32.xlu0 %v455, 64
    %v458 = vpop.permute.xlu0 %457
    %v460 = vmul.f32 %v442, %v458
    %v461 = vpack.c.bf16 %v460, %v460
    %463 = vrot.lane.b32.xlu0 %v461, 32
    %v464 = vpop.permute.xlu0 %463
    %v466 = vsel %vm176, %v464, 0
    %468 = vmatprep.subr.bf16.mxu0 0
    %469 = vmatpush1.bf16.msra.mxu0 %v172
    %470 = vmatprep.subr.bf16.mxu0 0
    %471 = vmatpush1.bf16.msra.mxu0 %v173
    %472 = vmatprep.subr.bf16.mxu0 0
    %473 = vmatpush1.bf16.msra.mxu0 0
    %474 = vmatprep.subr.bf16.mxu0 0
    %475 = vmatpush1.bf16.msra.mxu0 0
    %476 = vmatprep.subr.bf16.mxu0 0
    %477 = vmatpush1.bf16.msra.mxu0 0
    %478 = vmatprep.subr.bf16.mxu0 0
    %479 = vmatpush1.bf16.msra.mxu0 0
    %480 = vmatprep.subr.bf16.mxu0 0
    %481 = vmatpush1.bf16.msra.mxu0 0
    %482 = vmatprep.subr.bf16.mxu0 0
    %483 = vmatpush1.bf16.msra.mxu0 0
    %484 = vmatprep.subr.bf16.mxu0 0
    %485 = vmatpush1.bf16.msra.mxu0 0
    %486 = vmatprep.subr.bf16.mxu0 0
    %487 = vmatpush1.bf16.msra.mxu0 0
    %488 = vmatprep.subr.bf16.mxu0 0
    %489 = vmatpush1.bf16.msra.mxu0 0
    %490 = vmatprep.subr.bf16.mxu0 0
    %491 = vmatpush1.bf16.msra.mxu0 0
    %492 = vmatprep.subr.bf16.mxu0 0
    %493 = vmatpush1.bf16.msra.mxu0 0
    %494 = vmatprep.subr.bf16.mxu0 0
    %495 = vmatpush1.bf16.msra.mxu0 0
    %496 = vmatprep.subr.bf16.mxu0 0
    %497 = vmatpush1.bf16.msra.mxu0 0
    %498 = vmatprep.subr.bf16.mxu0 0
    %499 = vmatpush1.bf16.msra.mxu0 0
    %500 = vmatprep.mubr.bf16.mxu0 0
    %501 = vmatmul.mubr.bf16.gmra.mrb[0].mxu0 %v466
    %v502 = vpop.f32.mrb[0].mxu0
    %v503 = vadd.f32 0.0, %v502
    %v504 = vpop.f32.mrb[0].mxu0
    %v505 = vpop.f32.mrb[0].mxu0
    %v506 = vpop.f32.mrb[0].mxu0
    %507 = vdwg.mxu0
    %v508 = vadd.f32 %v153, %v503
    %v509 = vxor.u32 %v508, 2147483648
    %v510 = vmul.f32 %v509, 1.442695
    %v511 = vpow.pop %v510
    %v512 = vadd.f32 %v511, 1.0
    %v513 = vrcp.pop %v512
    %v514 = vmul.f32 1.0, %v513
    %v515 = vtanh.pop %v508
    %v516 = vmul.f32 %v514, %v454
    %518 = vrot.lane.b32.xlu0 %v515, 64
    %v519 = vpop.permute.xlu0 %518
    %v521 = vmul.f32 %v514, %v519
    %523 = vrot.lane.b32.xlu0 %v521, 32
    %v524 = vpop.permute.xlu0 %523
    %v526 = vadd.f32 %v516, %v524
    %v527 = vtanh.pop %v526
    %529 = vrot.lane.b32.xlu0 %v527, 64
    %v530 = vpop.permute.xlu0 %529
    %v532 = vmul.f32 %v514, %v530
    %v533 = vpack.c.bf16 %v532, %v532
    %535 = vrot.lane.b32.xlu0 %v533, 32
    %v536 = vpop.permute.xlu0 %535
    %v538 = vsel %vm176, %v536, 0
    %540 = vmatprep.subr.bf16.mxu0 0
    %541 = vmatpush1.bf16.msra.mxu0 %v172
    %542 = vmatprep.subr.bf16.mxu0 0
    %543 = vmatpush1.bf16.msra.mxu0 %v173
    %544 = vmatprep.subr.bf16.mxu0 0
    %545 = vmatpush1.bf16.msra.mxu0 0
    %546 = vmatprep.subr.bf16.mxu0 0
    %547 = vmatpush1.bf16.msra.mxu0 0
    %548 = vmatprep.subr.bf16.mxu0 0
    %549 = vmatpush1.bf16.msra.mxu0 0
    %550 = vmatprep.subr.bf16.mxu0 0
    %551 = vmatpush1.bf16.msra.mxu0 0
    %552 = vmatprep.subr.bf16.mxu0 0
    %553 = vmatpush1.bf16.msra.mxu0 0
    %554 = vmatprep.subr.bf16.mxu0 0
    %555 = vmatpush1.bf16.msra.mxu0 0
    %556 = vmatprep.subr.bf16.mxu0 0
    %557 = vmatpush1.bf16.msra.mxu0 0
    %558 = vmatprep.subr.bf16.mxu0 0
    %559 = vmatpush1.bf16.msra.mxu0 0
    %560 = vmatprep.subr.bf16.mxu0 0
    %561 = vmatpush1.bf16.msra.mxu0 0
    %562 = vmatprep.subr.bf16.mxu0 0
    %563 = vmatpush1.bf16.msra.mxu0 0
    %564 = vmatprep.subr.bf16.mxu0 0
    %565 = vmatpush1.bf16.msra.mxu0 0
    %566 = vmatprep.subr.bf16.mxu0 0
    %567 = vmatpush1.bf16.msra.mxu0 0
    %568 = vmatprep.subr.bf16.mxu0 0
    %569 = vmatpush1.bf16.msra.mxu0 0
    %570 = vmatprep.subr.bf16.mxu0 0
    %571 = vmatpush1.bf16.msra.mxu0 0
    %572 = vmatprep.mubr.bf16.mxu0 0
    %573 = vmatmul.mubr.bf16.gmra.mrb[0].mxu0 %v538
    %v574 = vpop.f32.mrb[0].mxu0
    %v575 = vadd.f32 0.0, %v574
    %v576 = vpop.f32.mrb[0].mxu0
    %v577 = vpop.f32.mrb[0].mxu0
    %v578 = vpop.f32.mrb[0].mxu0
    %579 = vdwg.mxu0
    %v580 = vadd.f32 %v156, %v575
    %v581 = vxor.u32 %v580, 2147483648
    %v582 = vmul.f32 %v581, 1.442695
    %v583 = vpow.pop %v582
    %v584 = vadd.f32 %v583, 1.0
    %v585 = vrcp.pop %v584
    %v586 = vmul.f32 1.0, %v585
    %v587 = vtanh.pop %v580
    %v588 = vmul.f32 %v586, %v526
    %590 = vrot.lane.b32.xlu0 %v587, 64
    %v591 = vpop.permute.xlu0 %590
    %v593 = vmul.f32 %v586, %v591
    %595 = vrot.lane.b32.xlu0 %v593, 32
    %v596 = vpop.permute.xlu0 %595
    %v598 = vadd.f32 %v588, %v596
    %v599 = vtanh.pop %v598
    %601 = vrot.lane.b32.xlu0 %v599, 64
    %v602 = vpop.permute.xlu0 %601
    %v604 = vmul.f32 %v586, %v602
    %v605 = vxor.u32 %v158, 2147483648
    %v606 = vmul.f32 %v605, 1.442695
    %v607 = vpow.pop %v606
    %v608 = vadd.f32 %v607, 1.0
    %v609 = vrcp.pop %v608
    %v610 = vmul.f32 1.0, %v609
    %v611 = vtanh.pop %v158
    %613 = vrot.lane.b32.xlu0 %v611, 64
    %v614 = vpop.permute.xlu0 %613
    %v616 = vmul.f32 %v610, %v614
    %v617 = vtanh.pop %v616
    %619 = vrot.lane.b32.xlu0 %v617, 96
    %v620 = vpop.permute.xlu0 %619
    %v622 = vmul.f32 %v610, %v620
    %v623 = vpack.c.bf16 %v604, %v604
    %v624 = vld [vmem:[#allocation2] sm:$0xf]
    %v625 = vld [vmem:[#allocation2 + $0x4] sm:$0xf]
    %v626 = vld [vmem:[#allocation2 + $0x8] sm:$0xf]
    %v627 = vld [vmem:[#allocation2 + $0xc] sm:$0xf]
    %v628 = vpack.c.bf16 %v622, %v622
    %v629 = vld [vmem:[%s5] sm:$0xf]
    %v630 = vld [vmem:[%s5 + $0x4] sm:$0xf]
    %v631 = vld [vmem:[%s5 + $0x8] sm:$0xf]
    %v632 = vld [vmem:[%s5 + $0xc] sm:$0xf]
    %634 = vrot.lane.b32.xlu0 %v628, 32
    %v635 = vpop.permute.xlu0 %634
    %v640 = vunpack.c.l.b16 %v629
    %v641 = vunpack.c.l.b16 %v630
    %v642 = vunpack.c.l.b16 %v631
    %v643 = vunpack.c.l.b16 %v632
    %v644 = vpack.c.b16 %v641, %v640
    %v645 = vpack.c.b16 %v643, %v642
    %v649 = vsel %vm176, %v635, 0
    %651 = vmatprep.subr.bf16.mxu0 0
    %652 = vmatpush1.bf16.msra.mxu0 %v644
    %653 = vmatprep.subr.bf16.mxu0 0
    %654 = vmatpush1.bf16.msra.mxu0 %v645
    %655 = vmatprep.subr.bf16.mxu0 0
    %656 = vmatpush1.bf16.msra.mxu0 0
    %657 = vmatprep.subr.bf16.mxu0 0
    %658 = vmatpush1.bf16.msra.mxu0 0
    %659 = vmatprep.subr.bf16.mxu0 0
    %660 = vmatpush1.bf16.msra.mxu0 0
    %661 = vmatprep.subr.bf16.mxu0 0
    %662 = vmatpush1.bf16.msra.mxu0 0
    %663 = vmatprep.subr.bf16.mxu0 0
    %664 = vmatpush1.bf16.msra.mxu0 0
    %665 = vmatprep.subr.bf16.mxu0 0
    %666 = vmatpush1.bf16.msra.mxu0 0
    %667 = vmatprep.subr.bf16.mxu0 0
    %668 = vmatpush1.bf16.msra.mxu0 0
    %669 = vmatprep.subr.bf16.mxu0 0
    %670 = vmatpush1.bf16.msra.mxu0 0
    %671 = vmatprep.subr.bf16.mxu0 0
    %672 = vmatpush1.bf16.msra.mxu0 0
    %673 = vmatprep.subr.bf16.mxu0 0
    %674 = vmatpush1.bf16.msra.mxu0 0
    %675 = vmatprep.subr.bf16.mxu0 0
    %676 = vmatpush1.bf16.msra.mxu0 0
    %677 = vmatprep.subr.bf16.mxu0 0
    %678 = vmatpush1.bf16.msra.mxu0 0
    %679 = vmatprep.subr.bf16.mxu0 0
    %680 = vmatpush1.bf16.msra.mxu0 0
    %681 = vmatprep.subr.bf16.mxu0 0
    %682 = vmatpush1.bf16.msra.mxu0 0
    %683 = vmatprep.mubr.bf16.mxu0 0
    %684 = vmatmul.mubr.bf16.gmra.mrb[0].mxu0 %v649
    %v685 = vpop.f32.mrb[0].mxu0
    %v686 = vadd.f32 0.0, %v685
    %v687 = vpop.f32.mrb[0].mxu0
    %v688 = vpop.f32.mrb[0].mxu0
    %v689 = vpop.f32.mrb[0].mxu0
    %690 = vdwg.mxu0
    %692 = vrot.lane.b32.xlu0 %v623, 32
    %v693 = vpop.permute.xlu0 %692
    %v698 = vunpack.c.l.b16 %v624
    %v699 = vunpack.c.l.b16 %v625
    %v700 = vunpack.c.l.b16 %v626
    %v701 = vunpack.c.l.b16 %v627
    %v702 = vpack.c.b16 %v699, %v698
    %v703 = vpack.c.b16 %v701, %v700
    %v707 = vsel %vm176, %v693, 0
    %709 = vmatprep.subr.bf16.mxu0 0
    %710 = vmatpush1.bf16.msra.mxu0 %v702
    %711 = vmatprep.subr.bf16.mxu0 0
    %712 = vmatpush1.bf16.msra.mxu0 %v703
    %713 = vmatprep.subr.bf16.mxu0 0
    %714 = vmatpush1.bf16.msra.mxu0 0
    %715 = vmatprep.subr.bf16.mxu0 0
    %716 = vmatpush1.bf16.msra.mxu0 0
    %717 = vmatprep.subr.bf16.mxu0 0
    %718 = vmatpush1.bf16.msra.mxu0 0
    %719 = vmatprep.subr.bf16.mxu0 0
    %720 = vmatpush1.bf16.msra.mxu0 0
    %721 = vmatprep.subr.bf16.mxu0 0
    %722 = vmatpush1.bf16.msra.mxu0 0
    %723 = vmatprep.subr.bf16.mxu0 0
    %724 = vmatpush1.bf16.msra.mxu0 0
    %725 = vmatprep.subr.bf16.mxu0 0
    %726 = vmatpush1.bf16.msra.mxu0 0
    %727 = vmatprep.subr.bf16.mxu0 0
    %728 = vmatpush1.bf16.msra.mxu0 0
    %729 = vmatprep.subr.bf16.mxu0 0
    %730 = vmatpush1.bf16.msra.mxu0 0
    %731 = vmatprep.subr.bf16.mxu0 0
    %732 = vmatpush1.bf16.msra.mxu0 0
    %733 = vmatprep.subr.bf16.mxu0 0
    %734 = vmatpush1.bf16.msra.mxu0 0
    %735 = vmatprep.subr.bf16.mxu0 0
    %736 = vmatpush1.bf16.msra.mxu0 0
    %737 = vmatprep.subr.bf16.mxu0 0
    %738 = vmatpush1.bf16.msra.mxu0 0
    %739 = vmatprep.subr.bf16.mxu0 0
    %740 = vmatpush1.bf16.msra.mxu0 0
    %741 = vmatprep.mubr.bf16.mxu0 0
    %742 = vmatmul.mubr.bf16.gmra.mrb[0].mxu0 %v707
    %v743 = vpop.f32.mrb[0].mxu0
    %v744 = vadd.f32 %v686, %v743
    %v745 = vpop.f32.mrb[0].mxu0
    %v746 = vpop.f32.mrb[0].mxu0
    %v747 = vpop.f32.mrb[0].mxu0
    %748 = vdwg.mxu0
    %v749 = vld [vmem:[%s6] sm:$0x1]
    %v751 = vlaneseq
    %v752 = vshrl.u32 %v751, 7
    %v753 = vsub.s32 0, %v752
    %v754 = vrot.slane %v749, %v753
    %v756 = vadd.f32 %v744, %v754
    %757 = vst.msk [vmem:[#allocation5] sm:$0xff] %vm176, %v756
    // Predicated region
    $region34: #{tpu_custom_call.1} parent=1 // pred_check
      _
    $region35: #{tpu_custom_call.1} parent=1 // pred_check_branch
      %759 = sbr.rel (0) target = $region37
    $region36: #{tpu_custom_call.1} parent=1 // pred_region
      %s761 = ssub.s32 128, 128
      %762 = vsyncadd [#allocation4], %s761
      %s764 = sshll.u32 [#allocation5], 4
      %s765 = int_to_ptr.vmem [resolvable:$true] %s764
      %767 = dma.vmem_to_hbm [thread:$0]  %s765, 128, %s7, [#allocation4]
    $region37: #{tpu_custom_call.1} parent=1 // pred_fallthru
      _
    // Predicated region
    $region38: #{tpu_custom_call.1} parent=1 // pred_check
      _
    $region39: #{tpu_custom_call.1} parent=1 // pred_check_branch
      %769 = sbr.rel (0) target = $region41
    $region40: #{tpu_custom_call.1} parent=1 // pred_region
      %770 = dma.done [#allocation4], 128
    $region41: #{tpu_custom_call.1} parent=1 // pred_fallthru
      _
    %771 = vsyncpa [#allocation3], 1
    %772 = vsyncpa [#allocation4], 1

</llo_original>
